<compile_context>
chip_gen: v7x
topology: tpu7x:2x2x1
jax: 0.10.0
libtpu: 0.0.40
codegen_flags: <defaults>
</compile_context>

<pallas_src>
import functools

import jax
import jax.numpy as jnp
from jax import lax
from jax.experimental import pallas as pl
from jax.experimental.pallas import tpu as pltpu

EPS = 1e-5
MOMENTUM = 0.1
_LANE = 128
_SUBLANE = 8


# --------------------------------------------------------------------------- sizing helpers
def _vmem_budget_and_limit():
    """Per-generation scoped-VMEM (limit) and per-step tile budget (with headroom)."""
    cap = 128 * 1024 * 1024                     # v5e/v6e physical VMEM
    try:
        info = pltpu.get_tpu_info()
        cap = int(getattr(info, "vmem_capacity_bytes", cap)) or cap
    except Exception:
        pass
    limit = min(cap * 3 // 4, 100 * 1024 * 1024)   # ~96 MiB v5e/v6e, ~48 MiB v7x (64 MiB phys)
    budget = limit * 3 // 4                        # headroom for compiler scratch / spills
    return budget, limit


def _pick_tile_c(C):
    """Feature tile: lane-aligned divisor of C (prefer >=2 grid steps for v7x megacore),
    or the full extent for ragged C (legal; avoids any pad/slice of x)."""
    if C % _LANE != 0:
        return C
    best = None
    for t in (1024, 512, 256, 128):
        if C % t == 0:
            if C // t >= 2:
                return t
            if best is None:
                best = t
    return best if best is not None else _LANE


def _fused_fits(n_rows, tile_c, itemsize, budget):
    # Double-buffered x-in + out blocks, plus ~3 full-tile f32 temporaries the compiler
    # materializes in VMEM (f32 upcast, centered, centered^2) for blocks beyond the vreg file.
    step = 2 * (2 * n_rows * tile_c * itemsize) + 3 * n_rows * tile_c * 4 + 16 * tile_c * 4
    return step <= budget


def _pick_tile_n(n_rows, tile_c, itemsize, budget, max_tile_n=None):
    """Row tile for the N-tiled kernels (multiple of 8 unless it covers the full batch)."""
    def step_bytes(t):
        # double-buffered x-in + out blocks plus ~2 full-block f32 temporaries
        return 2 * (2 * t * tile_c * itemsize) + 2 * t * tile_c * 4

    if step_bytes(n_rows) <= budget:
        tile_n = n_rows
    else:
        tile_n = _SUBLANE
        for t in (4096, 2048, 1024, 512, 256, 128, 64, 32, 16, 8):
            if t < n_rows and step_bytes(t) <= budget:
                tile_n = t
                break
    if max_tile_n is not None and max_tile_n < tile_n:
        tile_n = max(max_tile_n, _SUBLANE)
        if tile_n < n_rows:
            tile_n = max(_SUBLANE, (tile_n // _SUBLANE) * _SUBLANE)
    return tile_n


# --------------------------------------------------------------------------- kernels
def _bn1d_train_fused_kernel(x_ref, w_ref, b_ref, rv_ref, o_ref, rv_out_ref, *,
                             n_rows, eps, momentum):
    """Whole-batch fused kernel: stats + normalize + running-var EMA in one HBM read."""
    xf = x_ref[...].astype(jnp.float32)                       # (N, tile_c)
    inv_n = 1.0 / n_rows
    mean = jnp.sum(xf, axis=0, keepdims=True) * inv_n         # (1, tile_c)
    centered = xf - mean                                      # mean-centred: no cancellation
    var = jnp.sum(centered * centered, axis=0, keepdims=True) * inv_n   # unbiased=False
    scale = lax.rsqrt(var + eps) * w_ref[...]                 # EUP rsqrt, fused affine scale
    # Output = x * scale + bias (mean NOT subtracted); f32 FMA, cast only on the store.
    o_ref[...] = (xf * scale + b_ref[...]).astype(o_ref.dtype)
    # Running-var EMA epilogue (matches the module source: momentum*rv + (1-momentum)*biased var).
    rv_out_ref[...] = momentum * rv_ref[...] + (1.0 - momentum) * var


def _bn1d_stats_kernel(x_ref, w_ref, rv_ref, scale_ref, rv_out_ref, sum_sc, sumsq_sc, *,
                       n_rows, tile_n, eps, momentum):
    """Two-pass variant, pass 1: accumulate masked sum/sumsq over N chunks, finalize stats."""
    n = pl.program_id(1)

    @pl.when(n == 0)
    def _():
        sum_sc[...] = jnp.zeros_like(sum_sc)
        sumsq_sc[...] = jnp.zeros_like(sumsq_sc)

    xf = x_ref[...].astype(jnp.float32)                        # (tile_n, tile_c)
    row = lax.broadcasted_iota(jnp.int32, xf.shape, 0) + n * tile_n
    xm = jnp.where(row < n_rows, xf, 0.0)                      # mask ragged N tail (stale VMEM)
    sum_sc[...] += jnp.sum(xm, axis=0, keepdims=True)
    sumsq_sc[...] += jnp.sum(xm * xm, axis=0, keepdims=True)

    @pl.when(n == pl.num_programs(1) - 1)
    def _():
        inv_n = 1.0 / n_rows
        mean = sum_sc[...] * inv_n
        # TODO(synk): E[x^2]-E[x]^2 can lose precision for |mean| >> std; a shifted/Welford
        # accumulation would fix it at the cost of extra state per chunk.
        var = jnp.maximum(sumsq_sc[...] * inv_n - mean * mean, 0.0)
        scale_ref[...] = lax.rsqrt(var + eps) * w_ref[...]
        rv_out_ref[...] = momentum * rv_ref[...] + (1.0 - momentum) * var


def _bn1d_apply_kernel(x_ref, scale_ref, b_ref, o_ref):
    """Elementwise x*scale + bias (used for two-pass pass 2 and for eval mode)."""
    xf = x_ref[...].astype(jnp.float32)
    o_ref[...] = (xf * scale_ref[...] + b_ref[...]).astype(o_ref.dtype)


# --------------------------------------------------------------------------- wrappers
def _apply_scale_bias(x, scale, bias2, tile_c, tile_n, limit):
    N, C = x.shape
    x_spec = pl.BlockSpec((tile_n, tile_c), lambda j, n: (n, j))
    row_spec = pl.BlockSpec((1, tile_c), lambda j, n: (0, j))
    # TODO(synk): consider pipeline_mode=pl.Buffered(3) on x_spec for v7x once on the roofline.
    return pl.pallas_call(
        _bn1d_apply_kernel,
        grid=(C // tile_c, pl.cdiv(N, tile_n)),
        in_specs=[x_spec, row_spec, row_spec],
        out_specs=x_spec,
        out_shape=jax.ShapeDtypeStruct((N, C), x.dtype),
        compiler_params=pltpu.CompilerParams(
            dimension_semantics=("parallel", "parallel"),
            vmem_limit_bytes=limit),
    )(x, scale, bias2)


def batchnorm1d_scaling(x, weight, bias, running_var, *, eps=EPS, momentum=MOMENTUM,
                        training=True, _force_two_pass=False, _max_tile_n=None):
    """Forward pass of BatchNorm1dScaling for 2-D input (N, num_features).

    Returns (output, new_running_var).  In eval mode running_var is returned unchanged.
    The trailing underscore kwargs only force the large-N two-pass path for testing.
    """
    # TODO(synk): 3-D (N, C, L) inputs (reduction over dims [0, 2]) not implemented.
    # TODO(synk): momentum=None (cumulative average via num_batches_tracked) not implemented.
    assert x.ndim == 2, "only 2-D (N, num_features) input is supported"
    N, C = x.shape
    itemsize = x.dtype.itemsize
    budget, limit = _vmem_budget_and_limit()
    tile_c = _pick_tile_c(C)

    w2 = weight.reshape(1, C).astype(jnp.float32)
    b2 = bias.reshape(1, C).astype(jnp.float32)
    rv2 = running_var.reshape(1, C).astype(jnp.float32)

    if not training:
        # Eval: normalize by running_var; tiny (1, C) precompute outside the kernel.
        scale = w2 * lax.rsqrt(rv2 + eps)
        tile_n = _pick_tile_n(N, tile_c, itemsize, budget, _max_tile_n)
        out = _apply_scale_bias(x, scale, b2, tile_c, tile_n, limit)
        return out, running_var

    # Training: prefer the fused single-HBM-read kernel; shrink the feature tile if that lets
    # the whole batch fit VMEM; otherwise use the two-pass reduce-then-normalize variant.
    fused_tile_c = None
    if not _force_two_pass:
        candidates = [tile_c]
        if C % _LANE == 0:
            candidates += [t for t in (512, 256, 128) if t < tile_c and C % t == 0]
        for t in candidates:
            if _fused_fits(N, t, itemsize, budget):
                fused_tile_c = t
                break

    if fused_tile_c is not None:
        tc = fused_tile_c
        x_spec = pl.BlockSpec((N, tc), lambda j: (0, j))
        row_spec = pl.BlockSpec((1, tc), lambda j: (0, j))
        kernel = functools.partial(_bn1d_train_fused_kernel,
                                   n_rows=N, eps=eps, momentum=momentum)
        out, rv_new = pl.pallas_call(
            kernel,
            grid=(C // tc,),
            in_specs=[x_spec, row_spec, row_spec, row_spec],
            out_specs=(x_spec, row_spec),
            out_shape=(jax.ShapeDtypeStruct((N, C), x.dtype),
                       jax.ShapeDtypeStruct((1, C), jnp.float32)),
            compiler_params=pltpu.CompilerParams(
                dimension_semantics=("parallel",),
                vmem_limit_bytes=limit),
        )(x, w2, b2, rv2)
        return out, rv_new.reshape(C).astype(running_var.dtype)

    # Two-pass path (large N): pass 1 reduces N chunks into per-feature stats, pass 2 normalizes.
    tile_n = _pick_tile_n(N, tile_c, itemsize, budget, _max_tile_n)
    x_spec = pl.BlockSpec((tile_n, tile_c), lambda j, n: (n, j))
    row_spec = pl.BlockSpec((1, tile_c), lambda j, n: (0, j))
    stats_kernel = functools.partial(_bn1d_stats_kernel, n_rows=N, tile_n=tile_n,
                                     eps=eps, momentum=momentum)
    scale, rv_new = pl.pallas_call(
        stats_kernel,
        grid=(C // tile_c, pl.cdiv(N, tile_n)),
        in_specs=[x_spec, row_spec, row_spec],
        out_specs=(row_spec, row_spec),
        out_shape=(jax.ShapeDtypeStruct((1, C), jnp.float32),
                   jax.ShapeDtypeStruct((1, C), jnp.float32)),
        scratch_shapes=[pltpu.VMEM((1, tile_c), jnp.float32),
                        pltpu.VMEM((1, tile_c), jnp.float32)],
        compiler_params=pltpu.CompilerParams(
            dimension_semantics=("parallel", "arbitrary"),
            vmem_limit_bytes=limit),
    )(x, w2, rv2)
    out = _apply_scale_bias(x, scale, b2, tile_c, tile_n, limit)
    return out, rv_new.reshape(C).astype(running_var.dtype)


# --------------------------------------------------------------------------- self-test
if __name__ == "__main__":
    key = jax.random.PRNGKey(0)

    # Small fused-path test: batch=8, num_features=32 (BatchNorm1d 2-D input).
    N, C = 8, 32
    x = jax.random.normal(key, (N, C), dtype=jnp.float32)
    weight = jnp.ones((C,), jnp.float32)        # init.ones_
    bias = jnp.zeros((C,), jnp.float32)         # init.zeros_
    running_var = jnp.ones((C,), jnp.float32)   # reset_running_stats fills with 1

    out, new_rv = batchnorm1d_scaling(x, weight, bias, running_var, training=True)
    out = jax.block_until_ready(out)
    new_rv = jax.block_until_ready(new_rv)

    var_ref = jnp.var(x, axis=0)                                   # unbiased=False
    ref_out = x / jnp.sqrt(var_ref + EPS) * weight + bias
    ref_rv = MOMENTUM * running_var + (1.0 - MOMENTUM) * var_ref
    assert jnp.allclose(out, ref_out, atol=1e-4, rtol=1e-4), "train output mismatch"
    assert jnp.allclose(new_rv, ref_rv, atol=1e-4, rtol=1e-4), "running_var mismatch"

    # Eval-mode path (normalize by running_var, buffers untouched).
    out_eval, rv_eval = batchnorm1d_scaling(x, weight, bias, new_rv, training=False)
    out_eval = jax.block_until_ready(out_eval)
    ref_eval = x / jnp.sqrt(ref_rv + EPS) * weight + bias
    assert jnp.allclose(out_eval, ref_eval, atol=1e-4, rtol=1e-4), "eval output mismatch"
    assert jnp.allclose(rv_eval, new_rv), "eval must not modify running_var"

    # Two-pass (large-N fallback) path test with a ragged N tail: N=200, C=384.
    N2, C2 = 200, 384
    x2 = jax.random.normal(jax.random.PRNGKey(1), (N2, C2), dtype=jnp.float32)
    w_2 = 0.5 + jax.random.uniform(jax.random.PRNGKey(2), (C2,), dtype=jnp.float32)
    b_2 = 0.1 * jax.random.normal(jax.random.PRNGKey(3), (C2,), dtype=jnp.float32)
    rv_2 = jnp.ones((C2,), jnp.float32)

    out2, new_rv2 = batchnorm1d_scaling(x2, w_2, b_2, rv_2, training=True,
                                        _force_two_pass=True, _max_tile_n=64)
    out2 = jax.block_until_ready(out2)
    new_rv2 = jax.block_until_ready(new_rv2)
    var2 = jnp.var(x2, axis=0)
    ref_out2 = x2 / jnp.sqrt(var2 + EPS) * w_2 + b_2
    ref_rv2 = MOMENTUM * rv_2 + (1.0 - MOMENTUM) * var2
    assert jnp.allclose(out2, ref_out2, atol=1e-3, rtol=1e-3), "two-pass output mismatch"
    assert jnp.allclose(new_rv2, ref_rv2, atol=1e-3, rtol=1e-3), "two-pass running_var mismatch"

    print("KERNEL_OK")
</pallas_src>

<mosaic_0001>
module attributes {stable_mosaic.version = 11 : i64} {
  func.func @_bn1d_train_fused_kernel(%arg0: i32, %arg1: memref<8x32xf32, #tpu.memory_space<vmem>>, %arg2: memref<1x32xf32, #tpu.memory_space<vmem>>, %arg3: memref<1x32xf32, #tpu.memory_space<vmem>>, %arg4: memref<1x32xf32, #tpu.memory_space<vmem>>, %arg5: memref<8x32xf32, #tpu.memory_space<vmem>>, %arg6: memref<1x32xf32, #tpu.memory_space<vmem>>) attributes {dimension_semantics = [#tpu.dimension_semantics<parallel>], iteration_bounds = array<i64: 1>, scalar_prefetch = 0 : i64, scratch_operands = 0 : i64, tpu.core_type = #tpu.core_type<tc>, window_params = [{transform_indices = @transform_0, window_bounds = array<i64: 8, 32>}, {transform_indices = @transform_1, window_bounds = array<i64: 1, 32>}, {transform_indices = @transform_2, window_bounds = array<i64: 1, 32>}, {transform_indices = @transform_3, window_bounds = array<i64: 1, 32>}, {transform_indices = @transform_4, window_bounds = array<i64: 8, 32>}, {transform_indices = @transform_5, window_bounds = array<i64: 1, 32>}]} {
    %c0 = arith.constant 0 : index
    %c0_0 = arith.constant 0 : index
    %0 = vector.load %arg1[%c0, %c0_0] : memref<8x32xf32, #tpu.memory_space<vmem>>, vector<8x32xf32>
    %cst = arith.constant dense<0.000000e+00> : vector<32xf32>
    %1 = vector.multi_reduction <add>, %0, %cst [0] : vector<8x32xf32> to vector<32xf32>
    %2 = vector.shape_cast %1 : vector<32xf32> to vector<1x32xf32>
    %cst_1 = arith.constant 1.250000e-01 : f32
    %3 = vector.broadcast %cst_1 : f32 to vector<1x32xf32>
    %4 = arith.mulf %2, %3 : vector<1x32xf32>
    %5 = vector.broadcast %4 : vector<1x32xf32> to vector<8x32xf32>
    %6 = arith.subf %0, %5 : vector<8x32xf32>
    %7 = arith.mulf %6, %6 : vector<8x32xf32>
    %cst_2 = arith.constant dense<0.000000e+00> : vector<32xf32>
    %8 = vector.multi_reduction <add>, %7, %cst_2 [0] : vector<8x32xf32> to vector<32xf32>
    %9 = vector.shape_cast %8 : vector<32xf32> to vector<1x32xf32>
    %cst_3 = arith.constant 1.250000e-01 : f32
    %10 = vector.broadcast %cst_3 : f32 to vector<1x32xf32>
    %11 = arith.mulf %9, %10 : vector<1x32xf32>
    %cst_4 = arith.constant 9.99999974E-6 : f32
    %12 = vector.broadcast %cst_4 : f32 to vector<1x32xf32>
    %13 = arith.addf %11, %12 : vector<1x32xf32>
    %14 = math.rsqrt %13 : vector<1x32xf32>
    %c0_5 = arith.constant 0 : index
    %c0_6 = arith.constant 0 : index
    %15 = vector.load %arg2[%c0_5, %c0_6] : memref<1x32xf32, #tpu.memory_space<vmem>>, vector<1x32xf32>
    %16 = arith.mulf %14, %15 : vector<1x32xf32>
    %17 = vector.broadcast %16 : vector<1x32xf32> to vector<8x32xf32>
    %18 = arith.mulf %0, %17 : vector<8x32xf32>
    %c0_7 = arith.constant 0 : index
    %c0_8 = arith.constant 0 : index
    %19 = vector.load %arg3[%c0_7, %c0_8] : memref<1x32xf32, #tpu.memory_space<vmem>>, vector<1x32xf32>
    %20 = vector.broadcast %19 : vector<1x32xf32> to vector<8x32xf32>
    %21 = arith.addf %18, %20 : vector<8x32xf32>
    %c0_9 = arith.constant 0 : index
    %c0_10 = arith.constant 0 : index
    %22 = vector.load %arg5[%c0_9, %c0_10] : memref<8x32xf32, #tpu.memory_space<vmem>>, vector<8x32xf32>
    tpu.vector_store %arg5[%c0_9, %c0_10], %21 {strides = array<i32>} : memref<8x32xf32, #tpu.memory_space<vmem>>, vector<8x32xf32>,
    %c0_11 = arith.constant 0 : index
    %c0_12 = arith.constant 0 : index
    %23 = vector.load %arg4[%c0_11, %c0_12] : memref<1x32xf32, #tpu.memory_space<vmem>>, vector<1x32xf32>
    %cst_13 = arith.constant 1.000000e-01 : f32
    %24 = vector.broadcast %cst_13 : f32 to vector<1x32xf32>
    %25 = arith.mulf %24, %23 : vector<1x32xf32>
    %cst_14 = arith.constant 0.899999976 : f32
    %26 = vector.broadcast %cst_14 : f32 to vector<1x32xf32>
    %27 = arith.mulf %26, %11 : vector<1x32xf32>
    %28 = arith.addf %25, %27 : vector<1x32xf32>
    %c0_15 = arith.constant 0 : index
    %c0_16 = arith.constant 0 : index
    %29 = vector.load %arg6[%c0_15, %c0_16] : memref<1x32xf32, #tpu.memory_space<vmem>>, vector<1x32xf32>
    tpu.vector_store %arg6[%c0_15, %c0_16], %28 {strides = array<i32>} : memref<1x32xf32, #tpu.memory_space<vmem>>, vector<1x32xf32>,
    return
  }
  func.func @transform_0(%arg0: i32) -> (i32, i32) {
    %c0_i32 = arith.constant 0 : i32
    %c0_i32_0 = arith.constant 0 : i32
    return %c0_i32, %arg0 : i32, i32
  }
  func.func @transform_1(%arg0: i32) -> (i32, i32) {
    %c0_i32 = arith.constant 0 : i32
    %c0_i32_0 = arith.constant 0 : i32
    return %c0_i32, %arg0 : i32, i32
  }
  func.func @transform_2(%arg0: i32) -> (i32, i32) {
    %c0_i32 = arith.constant 0 : i32
    %c0_i32_0 = arith.constant 0 : i32
    return %c0_i32, %arg0 : i32, i32
  }
  func.func @transform_3(%arg0: i32) -> (i32, i32) {
    %c0_i32 = arith.constant 0 : i32
    %c0_i32_0 = arith.constant 0 : i32
    return %c0_i32, %arg0 : i32, i32
  }
  func.func @transform_4(%arg0: i32) -> (i32, i32) {
    %c0_i32 = arith.constant 0 : i32
    %c0_i32_0 = arith.constant 0 : i32
    return %c0_i32, %arg0 : i32, i32
  }
  func.func @transform_5(%arg0: i32) -> (i32, i32) {
    %c0_i32 = arith.constant 0 : i32
    %c0_i32_0 = arith.constant 0 : i32
    return %c0_i32, %arg0 : i32, i32
  }
}

</mosaic_0001>

<llo_original>
// kernel: tpu_custom_call.1
$region0: #{tpu_custom_call.1}
  #allocation0 [shape = 'u32[]', space=smem, size = 0x4, offset = 0x4, fixed_abs, tag = 'smem constant byte address 0x4 - core index']
  #allocation1 [shape = 'u32[144,128]{1,0:T(1,128)}', space=vmem, size = 0x12000, scoped, tag = 'internal scratch']
  %s0 = inlined_call_operand.hbm [shape: f32[8,32], index: 0, kind: input, shape index: {}]
  %s1 = inlined_call_operand.hbm [shape: f32[1,32], index: 1, kind: input, shape index: {}]
  %s2 = inlined_call_operand.hbm [shape: f32[1,32], index: 2, kind: input, shape index: {}]
  %s3 = inlined_call_operand.hbm [shape: f32[1,32], index: 3, kind: input, shape index: {}]
  %s4 = inlined_call_operand.hbm [shape: f32[8,32], index: 4, kind: output, shape index: {0}]
  %s5 = inlined_call_operand.hbm [shape: f32[1,32], index: 5, kind: output, shape index: {1}]
  %6 = xla_tuple %s4, %s5
  %s7 = sld [smem:[#allocation0]]
  $region50: #{tpu_custom_call.1} parent=0
    _
  %s9 = ssub.s32 1, %s7
  %s10 = scalar_select 0, %s9, %s7
  $region1: #{tpu_custom_call.1} parent=0
    #allocation2 [shape = 'u8[4096]{0}', space=vmem, size = 0x1000, scoped, tag = 'input window, operand 0, single buffered']
    #allocation3 [shape = 's32[1]{0}', space=sflag, size = 0x4, scoped, tag = 'scoped memory for tpu_custom_call.1']
    #allocation4 [shape = 's32[1]{0}', space=sflag, size = 0x4, scoped, tag = 'scoped memory for tpu_custom_call.1']
    #allocation5 [shape = 'u8[512]{0}', space=vmem, size = 0x400, scoped, tag = 'input window, operand 1, single buffered']
    #allocation6 [shape = 's32[1]{0}', space=sflag, size = 0x4, scoped, tag = 'scoped memory for tpu_custom_call.1']
    #allocation7 [shape = 'u8[512]{0}', space=vmem, size = 0x400, scoped, tag = 'input window, operand 2, single buffered']
    #allocation8 [shape = 'u8[512]{0}', space=vmem, size = 0x400, scoped, tag = 'input window, operand 3, single buffered']
    #allocation9 [shape = 's32[1]{0}', space=sflag, size = 0x4, scoped, tag = 'scoped memory for tpu_custom_call.1']
    #allocation10 [shape = 'u8[4096]{0}', space=vmem, size = 0x1000, scoped, tag = 'output window, operand 0, single buffered']
    #allocation11 [shape = 'u8[512]{0}', space=vmem, size = 0x400, scoped, tag = 'output window, operand 1, single buffered']
    #allocation12 [shape = 's32[1]{0}', space=sflag, size = 0x4, scoped, tag = 'scoped memory for tpu_custom_call.1']
    %11 = vsyncpa [#allocation3], 0
    %12 = vsyncpa [#allocation6], 0
    %13 = vsyncpa [#allocation9], 0
    %14 = vsyncpa [#allocation4], 0
    %15 = vsyncpa [#allocation12], 0
    // Predicated region
    $region2: #{tpu_custom_call.1} parent=1 // pred_check
      _
    $region3: #{tpu_custom_call.1} parent=1 // pred_check_branch
      %17 = sbr.rel (0) target = $region5
    $region4: #{tpu_custom_call.1} parent=1 // pred_region
      %s19 = ssub.s32 128, 128
      %20 = vsyncadd [#allocation3], %s19
      %s22 = sshll.u32 [#allocation2], 4
      %s23 = int_to_ptr.vmem [resolvable:$true] %s22
      %25 = dma.hbm_to_vmem [thread:$0]  %s0, 128, %s23, [#allocation3]
    $region5: #{tpu_custom_call.1} parent=1 // pred_fallthru
      _
    // Predicated region
    $region6: #{tpu_custom_call.1} parent=1 // pred_check
      _
    $region7: #{tpu_custom_call.1} parent=1 // pred_check_branch
      %27 = sbr.rel (0) target = $region9
    $region8: #{tpu_custom_call.1} parent=1 // pred_region
      %s29 = ssub.s32 16, 16
      %30 = vsyncadd [#allocation6], %s29
      %s32 = sshll.u32 [#allocation5], 4
      %s33 = int_to_ptr.vmem [resolvable:$true] %s32
      %35 = dma.hbm_to_vmem [thread:$0]  %s1, 16, %s33, [#allocation6]
    $region9: #{tpu_custom_call.1} parent=1 // pred_fallthru
      _
    // Predicated region
    $region10: #{tpu_custom_call.1} parent=1 // pred_check
      _
    $region11: #{tpu_custom_call.1} parent=1 // pred_check_branch
      %37 = sbr.rel (0) target = $region13
    $region12: #{tpu_custom_call.1} parent=1 // pred_region
      %s39 = ssub.s32 16, 16
      %40 = vsyncadd [#allocation6], %s39
      %s42 = sshll.u32 [#allocation7], 4
      %s43 = int_to_ptr.vmem [resolvable:$true] %s42
      %45 = dma.hbm_to_vmem [thread:$0]  %s2, 16, %s43, [#allocation6]
    $region13: #{tpu_custom_call.1} parent=1 // pred_fallthru
      _
    // Predicated region
    $region14: #{tpu_custom_call.1} parent=1 // pred_check
      _
    $region15: #{tpu_custom_call.1} parent=1 // pred_check_branch
      %47 = sbr.rel (0) target = $region17
    $region16: #{tpu_custom_call.1} parent=1 // pred_region
      %s49 = ssub.s32 16, 16
      %50 = vsyncadd [#allocation9], %s49
      %s52 = sshll.u32 [#allocation8], 4
      %s53 = int_to_ptr.vmem [resolvable:$true] %s52
      %55 = dma.hbm_to_vmem [thread:$0]  %s3, 16, %s53, [#allocation9]
    $region17: #{tpu_custom_call.1} parent=1 // pred_fallthru
      _
    // Predicated region
    $region18: #{tpu_custom_call.1} parent=1 // pred_check
      _
    $region19: #{tpu_custom_call.1} parent=1 // pred_check_branch
      %57 = sbr.rel (0) target = $region21
    $region20: #{tpu_custom_call.1} parent=1 // pred_region
      %58 = dma.done [#allocation3], 128
    $region21: #{tpu_custom_call.1} parent=1 // pred_fallthru
      _
    // Predicated region
    $region22: #{tpu_custom_call.1} parent=1 // pred_check
      _
    $region23: #{tpu_custom_call.1} parent=1 // pred_check_branch
      %60 = sbr.rel (0) target = $region25
    $region24: #{tpu_custom_call.1} parent=1 // pred_region
      %61 = dma.done [#allocation6], 16
    $region25: #{tpu_custom_call.1} parent=1 // pred_fallthru
      _
    // Predicated region
    $region26: #{tpu_custom_call.1} parent=1 // pred_check
      _
    $region27: #{tpu_custom_call.1} parent=1 // pred_check_branch
      %63 = sbr.rel (0) target = $region29
    $region28: #{tpu_custom_call.1} parent=1 // pred_region
      %64 = dma.done [#allocation6], 16
    $region29: #{tpu_custom_call.1} parent=1 // pred_fallthru
      _
    // Predicated region
    $region30: #{tpu_custom_call.1} parent=1 // pred_check
      _
    $region31: #{tpu_custom_call.1} parent=1 // pred_check_branch
      %66 = sbr.rel (0) target = $region33
    $region32: #{tpu_custom_call.1} parent=1 // pred_region
      %67 = dma.done [#allocation9], 16
    $region33: #{tpu_custom_call.1} parent=1 // pred_fallthru
      _
    %v68 = vld [vmem:[#allocation2] sm:$0xff]
    %vm69 = vcmask 261120
    %v70 = vsel %vm69, %v68, 0.0
    %v71 = vrot.slane %v70, 4
    %v72 = vadd.f32 %v70, %v71
    %v73 = vrot.slane %v72, 2
    %v74 = vadd.f32 %v72, %v73
    %v75 = vrot.slane %v74, 1
    %v76 = vadd.f32 %v74, %v75
    %v77 = vmul.f32 %v76, 0.125
    %v78 = vsub.f32 %v68, %v77
    %v79 = vmul.f32 %v78, %v78
    %v80 = vsel %vm69, %v79, 0.0
    %v81 = vrot.slane %v80, 4
    %v82 = vadd.f32 %v80, %v81
    %v83 = vrot.slane %v82, 2
    %v84 = vadd.f32 %v82, %v83
    %v85 = vrot.slane %v84, 1
    %v86 = vadd.f32 %v84, %v85
    %v87 = vmul.f32 %v86, 0.125
    %v88 = vadd.f32 %v87, 1e-05
    %v89 = vrsqrt.pop %v88
    %v90 = vld [vmem:[#allocation5] sm:$0x1]
    %v91 = vmul.f32 %v89, %v90
    %v92 = vlaneseq
    %v93 = vshrl.u32 %v92, 7
    %v94 = vsub.s32 0, %v93
    %v95 = vrot.slane %v91, %v94
    %v96 = vmul.f32 %v68, %v95
    %v97 = vld [vmem:[#allocation7] sm:$0x1]
    %v99 = vlaneseq
    %v100 = vshrl.u32 %v99, 7
    %v101 = vsub.s32 0, %v100
    %v102 = vrot.slane %v97, %v101
    %v104 = vadd.f32 %v96, %v102
    %105 = vst.msk [vmem:[#allocation10] sm:$0xff] %vm69, %v104
    %v106 = vld [vmem:[#allocation8] sm:$0x1]
    %v107 = vmul.f32 %v106, 0.1
    %v108 = vmul.f32 %v87, 0.9
    %v109 = vadd.f32 %v107, %v108
    %vm110 = vcmask 253952
    %111 = vst.msk [vmem:[#allocation11] sm:$0x1] %vm110, %v109
    // Predicated region
    $region34: #{tpu_custom_call.1} parent=1 // pred_check
      _
    $region35: #{tpu_custom_call.1} parent=1 // pred_check_branch
      %113 = sbr.rel (0) target = $region37
    $region36: #{tpu_custom_call.1} parent=1 // pred_region
      %s115 = ssub.s32 128, 128
      %116 = vsyncadd [#allocation4], %s115
      %s118 = sshll.u32 [#allocation10], 4
      %s119 = int_to_ptr.vmem [resolvable:$true] %s118
      %121 = dma.vmem_to_hbm [thread:$0]  %s119, 128, %s4, [#allocation4]
    $region37: #{tpu_custom_call.1} parent=1 // pred_fallthru
      _
    // Predicated region
    $region38: #{tpu_custom_call.1} parent=1 // pred_check
      _
    $region39: #{tpu_custom_call.1} parent=1 // pred_check_branch
      %123 = sbr.rel (0) target = $region41
    $region40: #{tpu_custom_call.1} parent=1 // pred_region
      %s125 = ssub.s32 16, 16
      %126 = vsyncadd [#allocation12], %s125
      %s128 = sshll.u32 [#allocation11], 4
      %s129 = int_to_ptr.vmem [resolvable:$true] %s128
      %131 = dma.vmem_to_hbm [thread:$0]  %s129, 16, %s5, [#allocation12]
    $region41: #{tpu_custom_call.1} parent=1 // pred_fallthru
      _
    // Predicated region
    $region42: #{tpu_custom_call.1} parent=1 // pred_check
      _
    $region43: #{tpu_custom_call.1} parent=1 // pred_check_branch
      %133 = sbr.rel (0) target = $region45
    $region44: #{tpu_custom_call.1} parent=1 // pred_region
      %134 = dma.done [#allocation4], 128
    $region45: #{tpu_custom_call.1} parent=1 // pred_fallthru
      _
    // Predicated region
    $region46: #{tpu_custom_call.1} parent=1 // pred_check
      _
    $region47: #{tpu_custom_call.1} parent=1 // pred_check_branch
      %136 = sbr.rel (0) target = $region49
    $region48: #{tpu_custom_call.1} parent=1 // pred_region
      %137 = dma.done [#allocation12], 16
    $region49: #{tpu_custom_call.1} parent=1 // pred_fallthru
      _
    %138 = vsyncpa [#allocation3], 1
    %139 = vsyncpa [#allocation6], 1
    %140 = vsyncpa [#allocation9], 1
    %141 = vsyncpa [#allocation4], 1
    %142 = vsyncpa [#allocation12], 1

</llo_original>
